<compile_context>
chip_gen: v7x
topology: tpu7x:2x2x1
jax: 0.10.0
libtpu: 0.0.40
codegen_flags: <defaults>
</compile_context>

<pallas_src>
import math
import functools

import jax
import jax.numpy as jnp
from jax.experimental import pallas as pl
from jax.experimental.pallas import tpu as pltpu


def _round_up(x, m):
    return ((x + m - 1) // m) * m


# --------------------------------------------------------------------------- #
# Kernel
# --------------------------------------------------------------------------- #
def _cape1d_kernel(x_ref, fs_ref, o_ref, *, batch, d_model, lane_dense):
    # x_ref / o_ref block: (bt, batch * d_model), lane-dense & contiguous.
    # fs_ref: (2, d_model) f32 -- row 0 = freq, row 1 = cos_shifts.
    bt = x_ref.shape[0]
    t0 = pl.program_id(0) * bt
    t_col = (jax.lax.broadcasted_iota(jnp.int32, (bt, 1), 0) + t0).astype(
        jnp.float32
    )
    freq = fs_ref[0:1, :]    # (1, d_model)
    shift = fs_ref[1:2, :]   # (1, d_model)
    # pos_emb is independent of batch: one sin per (t, c), in f32 on the EUP.
    pos = jnp.sin(t_col * freq + shift)        # (bt, d_model) f32
    # Single cast per block; batch adds/stores run in the I/O dtype.
    pos_x = pos.astype(o_ref.dtype)

    if not lane_dense:
        # D not a multiple of 128: per-batch D-wide stores would be masked
        # vst.msk partial stores.  Replicate pos across batch once and do a
        # single full-width (bt, batch*d_model) load-add-store instead.
        if batch > 1:
            pos_full = jnp.concatenate([pos_x] * batch, axis=-1)
        else:
            pos_full = pos_x
        o_ref[...] = x_ref[...] + pos_full
    elif batch <= 16:
        # D % 128 == 0: every slice store is already lane-dense; static
        # unroll is fine at small batch.
        for b in range(batch):
            sl = pl.ds(b * d_model, d_model)
            o_ref[:, sl] = x_ref[:, sl] + pos_x
    else:
        # Large batch: keep code size / vreg pressure bounded.
        def body(b, carry):
            start = pl.multiple_of(b * d_model, 128)  # valid: D % 128 == 0
            sl = pl.ds(start, d_model)
            o_ref[:, sl] = x_ref[:, sl] + pos_x
            return carry

        jax.lax.fori_loop(0, batch, body, 0)


# --------------------------------------------------------------------------- #
# Block / VMEM sizing
# --------------------------------------------------------------------------- #
def _tpu_vmem_capacity_bytes():
    try:
        return int(pltpu.get_tpu_info().vmem_capacity_bytes)
    except Exception:
        return 64 * 1024 * 1024  # conservative (v7x per-TC)


def _pick_time_block(T, row_bytes, extra_row_bytes, block_bytes, vmem_limit_bytes):
    # Rows per tile targeting ~block_bytes of x per tile.
    target = max(1, block_bytes // max(row_bytes, 1))
    bt = T if target >= T else max(8, (target // 8) * 8)
    # Clamp to the VMEM budget: double-buffered in+out tiles plus pos temps.
    per_row = 4 * row_bytes + extra_row_bytes
    budget = int(0.7 * vmem_limit_bytes)
    max_rows = max(8, ((budget // max(per_row, 1)) // 8) * 8)
    if bt > max_rows:
        bt = max_rows
    # Prefer >= ~8 grid steps (pipelining; lets v7x's 2 TCs share the grid) as
    # long as each x tile stays >= ~1 MiB (past the measured roofline knee).
    rows_1mib = max(8, _round_up(-(-(1 << 20) // max(row_bytes, 1)), 8))
    steps_cap = max(8, _round_up(pl.cdiv(T, 8), 8))
    if steps_cap >= rows_1mib and steps_cap < bt:
        bt = steps_cap
    return bt


# --------------------------------------------------------------------------- #
# pallas_call wrapper
# --------------------------------------------------------------------------- #
def _cape1d_impl(x, fs, *, block_bytes, vmem_limit_bytes, alias_input):
    T, B, D = x.shape
    BD = B * D
    itemsize = x.dtype.itemsize
    lane_dense = (D % 128 == 0)
    x2 = x.reshape(T, BD)  # free reshape: (T, B, D) is contiguous row-major.

    row_bytes = BD * itemsize
    extra_row_bytes = D * 4 + D * itemsize + (BD * itemsize if not lane_dense else 0)
    bt = _pick_time_block(T, row_bytes, extra_row_bytes, block_bytes, vmem_limit_bytes)
    grid = (pl.cdiv(T, bt),)  # no divisibility constraint on T

    cost = pl.CostEstimate(
        flops=2 * T * D + T * BD,
        transcendentals=T * D,
        bytes_accessed=2 * T * BD * itemsize + 2 * D * 4,
    )

    out2 = pl.pallas_call(
        functools.partial(_cape1d_kernel, batch=B, d_model=D, lane_dense=lane_dense),
        out_shape=jax.ShapeDtypeStruct((T, BD), x.dtype),
        grid_spec=pltpu.PrefetchScalarGridSpec(
            num_scalar_prefetch=0,
            grid=grid,
            in_specs=[
                pl.BlockSpec((bt, BD), lambda i: (i, 0)),
                pl.BlockSpec((2, D), lambda i: (0, 0)),  # stays VMEM-resident
            ],
            out_specs=pl.BlockSpec((bt, BD), lambda i: (i, 0)),
        ),
        compiler_params=pltpu.CompilerParams(
            dimension_semantics=("parallel",),
            vmem_limit_bytes=vmem_limit_bytes,
        ),
        cost_estimate=cost,
        input_output_aliases=({0: 0} if alias_input else {}),
    )(x2, fs)
    return out2.reshape(T, B, D)


_cape1d_call = jax.jit(
    functools.partial(_cape1d_impl, alias_input=False),
    static_argnames=("block_bytes", "vmem_limit_bytes"),
)
# Donating variant: out aliases x's HBM buffer (caller must not reuse x).
_cape1d_call_donate = jax.jit(
    functools.partial(_cape1d_impl, alias_input=True),
    static_argnames=("block_bytes", "vmem_limit_bytes"),
    donate_argnums=(0,),
)


def cape1d_forward(x, freq, cos_shifts, *, block_bytes=None,
                   vmem_limit_bytes=None, donate_x=False):
    """x: (T, B, D). freq, cos_shifts: (D,). Returns x + CAPE1d pos_emb."""
    if block_bytes is None or vmem_limit_bytes is None:
        cap = _tpu_vmem_capacity_bytes()
        if cap >= 96 * 1024 * 1024:            # v5e / v6e: 128 MiB VMEM
            bb, vl = 8 * 1024 * 1024, 80 * 1024 * 1024
        else:                                   # v7x (64 MiB / TC) or unknown
            bb, vl = 4 * 1024 * 1024, 48 * 1024 * 1024
        block_bytes = bb if block_bytes is None else block_bytes
        vmem_limit_bytes = vl if vmem_limit_bytes is None else vmem_limit_bytes
    fs = jnp.stack(
        [freq.astype(jnp.float32), cos_shifts.astype(jnp.float32)], axis=0
    )  # single packed (2, D) constant operand
    call = _cape1d_call_donate if donate_x else _cape1d_call
    return call(x, fs, block_bytes=block_bytes, vmem_limit_bytes=vmem_limit_bytes)


# --------------------------------------------------------------------------- #
# Buffers + pure-JAX reference
# --------------------------------------------------------------------------- #
def make_cape1d_buffers(d_model, freq_scale=1.0):
    """Deterministic buffers, same formulas as CAPE1d.__init__."""
    c = jnp.arange(d_model, dtype=jnp.float32)
    freq = freq_scale * jnp.exp(
        -2.0 * jnp.floor(c / 2.0) * (math.log(10000.0) / d_model)
    )
    cos_shifts = (math.pi / 2.0) * (c % 2)
    return freq, cos_shifts


def cape1d_reference(x, freq, cos_shifts):
    """Pure-JAX reference mirroring the PyTorch forward (eval mode)."""
    T, B, D = x.shape
    positions = jnp.broadcast_to(
        jnp.arange(T, dtype=jnp.float32)[None, :], (B, T)
    )  # (b, t)
    product = positions[:, :, None] * freq[None, None, :]
    pos_emb = jnp.sin(product + cos_shifts[None, None, :])  # (b, t, c)
    pos_emb = jnp.transpose(pos_emb, (1, 0, 2))  # (t, b, c)
    return x + pos_emb


if __name__ == "__main__":
    n_tokens, batch, d_model = 8, 2, 32
    key = jax.random.PRNGKey(0)
    x = jax.random.normal(key, (n_tokens, batch, d_model), dtype=jnp.float32)

    freq, cos_shifts = make_cape1d_buffers(d_model)
    ref = cape1d_reference(x, freq, cos_shifts)

    out = jax.block_until_ready(cape1d_forward(x, freq, cos_shifts))
    assert out.shape == (n_tokens, batch, d_model)
    assert out.dtype == x.dtype
    assert jnp.allclose(out, ref, atol=1e-5, rtol=1e-5), "mismatch vs reference"

    # Exercise the donating / input-output-aliased path on a fresh copy
    # (its buffer is consumed by the call, so it is not reused afterwards).
    x_donated = jnp.copy(x)
    out2 = jax.block_until_ready(
        cape1d_forward(x_donated, freq, cos_shifts, donate_x=True)
    )
    assert jnp.allclose(out2, ref, atol=1e-5, rtol=1e-5), "mismatch (donated path)"

    # TODO(synk): training-time random augmentations (global/local shift,
    # global scaling), x_lengths NaN-masking, positions_delta scaling and
    # normalize are not implemented (module defaults / eval mode make them
    # identity).
    print("KERNEL_OK")
</pallas_src>

<mosaic_0001>
module attributes {stable_mosaic.version = 11 : i64} {
  func.func @_cape1d_kernel(%arg0: i32, %arg1: memref<8x64xf32, #tpu.memory_space<vmem>>, %arg2: memref<2x32xf32, #tpu.memory_space<vmem>>, %arg3: memref<8x64xf32, #tpu.memory_space<vmem>>) attributes {dimension_semantics = [#tpu.dimension_semantics<parallel>], iteration_bounds = array<i64: 1>, scalar_prefetch = 0 : i64, scratch_operands = 0 : i64, tpu.core_type = #tpu.core_type<tc>, window_params = [{transform_indices = @transform_0, window_bounds = array<i64: 8, 64>}, {pipeline_mode = #tpu.pipeline_mode<synchronous>, transform_indices = @transform_1, window_bounds = array<i64: 2, 32>}, {transform_indices = @transform_2, window_bounds = array<i64: 8, 64>}]} {
    %c8_i32 = arith.constant 8 : i32
    %0 = arith.muli %arg0, %c8_i32 : i32
    %1 = tpu.iota {dimensions = array<i32: 0>} : vector<8x1xi32>
    %2 = vector.broadcast %0 : i32 to vector<8x1xi32>
    %3 = arith.addi %1, %2 : vector<8x1xi32>
    %4 = arith.sitofp %3 : vector<8x1xi32> to vector<8x1xf32>
    %c0 = arith.constant 0 : index
    %c0_0 = arith.constant 0 : index
    %5 = vector.load %arg2[%c0, %c0_0] : memref<2x32xf32, #tpu.memory_space<vmem>>, vector<1x32xf32>
    %c1 = arith.constant 1 : index
    %c0_1 = arith.constant 0 : index
    %6 = vector.load %arg2[%c1, %c0_1] : memref<2x32xf32, #tpu.memory_space<vmem>>, vector<1x32xf32>
    %7 = vector.broadcast %4 : vector<8x1xf32> to vector<8x32xf32>
    %8 = vector.broadcast %5 : vector<1x32xf32> to vector<8x32xf32>
    %9 = arith.mulf %7, %8 : vector<8x32xf32>
    %10 = vector.broadcast %6 : vector<1x32xf32> to vector<8x32xf32>
    %11 = arith.addf %9, %10 : vector<8x32xf32>
    %12 = math.sin %11 : vector<8x32xf32>
    %13 = tpu.concatenate %12, %12 in 1 : vector<8x32xf32>, vector<8x32xf32> -> vector<8x64xf32>
    %c0_2 = arith.constant 0 : index
    %c0_3 = arith.constant 0 : index
    %14 = vector.load %arg1[%c0_2, %c0_3] : memref<8x64xf32, #tpu.memory_space<vmem>>, vector<8x64xf32>
    %15 = arith.addf %14, %13 : vector<8x64xf32>
    %c0_4 = arith.constant 0 : index
    %c0_5 = arith.constant 0 : index
    %16 = vector.load %arg3[%c0_4, %c0_5] : memref<8x64xf32, #tpu.memory_space<vmem>>, vector<8x64xf32>
    tpu.vector_store %arg3[%c0_4, %c0_5], %15 {strides = array<i32>} : memref<8x64xf32, #tpu.memory_space<vmem>>, vector<8x64xf32>,
    return
  }
  func.func @transform_0(%arg0: i32) -> (i32, i32) {
    %c0_i32 = arith.constant 0 : i32
    %c0_i32_0 = arith.constant 0 : i32
    return %arg0, %c0_i32 : i32, i32
  }
  func.func @transform_1(%arg0: i32) -> (i32, i32) {
    %c0_i32 = arith.constant 0 : i32
    %c0_i32_0 = arith.constant 0 : i32
    %c0_i32_1 = arith.constant 0 : i32
    return %c0_i32, %c0_i32_0 : i32, i32
  }
  func.func @transform_2(%arg0: i32) -> (i32, i32) {
    %c0_i32 = arith.constant 0 : i32
    %c0_i32_0 = arith.constant 0 : i32
    return %arg0, %c0_i32 : i32, i32
  }
}

</mosaic_0001>

<llo_original>
// kernel: _cape1d_impl.1
$region0: #{_cape1d_impl.1}
  #allocation0 [shape = 'u32[]', space=smem, size = 0x4, offset = 0x4, fixed_abs, tag = 'smem constant byte address 0x4 - core index']
  #allocation1 [shape = 'u32[144,128]{1,0:T(1,128)}', space=vmem, size = 0x12000, scoped, tag = 'internal scratch']
  %s0 = inlined_call_operand.vmem [shape: f32[8,64], index: 0, kind: input, shape index: {}]
  %s1 = inlined_call_operand.vmem [shape: f32[2,32], index: 1, kind: input, shape index: {}]
  %s2 = inlined_call_operand.vmem [shape: f32[8,64], index: 2, kind: output, shape index: {}]
  %s3 = sld [smem:[#allocation0]]
  $region18: #{_cape1d_impl.1} parent=0
    _
  %s5 = ssub.s32 1, %s3
  %s6 = scalar_select 0, %s5, %s3
  // Predicated region
  $region2: #{_cape1d_impl.1} parent=0 // pred_check
    _
  $region3: #{_cape1d_impl.1} parent=0 // pred_check_branch
    %8 = sbr.rel (0) target = $region5
  $region4: #{_cape1d_impl.1} parent=0 // pred_region
    _
  $region5: #{_cape1d_impl.1} parent=0 // pred_fallthru
    _
  // Predicated region
  $region6: #{_cape1d_impl.1} parent=0 // pred_check
    _
  $region7: #{_cape1d_impl.1} parent=0 // pred_check_branch
    %10 = sbr.rel (0) target = $region9
  $region8: #{_cape1d_impl.1} parent=0 // pred_region
    _
  $region9: #{_cape1d_impl.1} parent=0 // pred_fallthru
    _
  %s11 = smul.u32 0, 8
  %v12 = vlaneseq
  %v13 = vshrl.u32 %v12, 7
  %v14 = vstv %s11
  %v15 = vadd.s32 %v13, %v14
  %v16 = vcvt.s32.f32 %v15
  %v17 = vld [vmem:[%s1] sm:$0x1]
  %v18 = vld [vmem:[%s1 + $0x1] sm:$0x1]
  %v19 = vlaneseq
  %v20 = vshrl.u32 %v19, 7
  %v21 = vsub.s32 0, %v20
  %v22 = vrot.slane %v17, %v21
  %v23 = vmul.f32 %v16, %v22
  %v24 = vlaneseq
  %v25 = vshrl.u32 %v24, 7
  %v26 = vsub.s32 0, %v25
  %v27 = vrot.slane %v18, %v26
  %v28 = vadd.f32 %v23, %v27
  %v29 = vand.u32 2147483647, %v28
  %vm30 = vcmp.le.f32.partialorder %v29, 0.7853982
  %vm31 = vcmp.lt.s32.totalorder %v28, 0
  %v32 = vand.u32 %v28, 2139095040
  %v33 = vshrl.u32 %v32, 23
  %v34 = vsub.s32 %v33, 127
  %v35 = vand.u32 2147483647, %v28
  %v36 = vand.u32 %v35, 8388607
  %v37 = vor.u32 %v36, 8388608
  %v38 = vsub.s32 0, %v37
  %v39 = vadd.s32 %v34, 1
  %vm40 = vcmp.gt.s32.totalorder %v39, 0
  %v41 = vsel %vm40, %v39, 0
  %v42 = vshrl.u32 %v41, 5
  %v43 = vand.u32 %v41, 31
  %v44 = vsub.s32 32, %v43
  %v45 = vshrl.u32 683565275, %v44
  %v46 = vshll.u32 683565275, %v43
  %v47 = vshrl.u32 2475754826, %v44
  %v48 = vor.u32 %v46, %v47
  %v49 = vshll.u32 2475754826, %v43
  %v50 = vshrl.u32 2131351028, %v44
  %v51 = vor.u32 %v49, %v50
  %v52 = vshll.u32 2131351028, %v43
  %v53 = vshrl.u32 2102212464, %v44
  %v54 = vor.u32 %v52, %v53
  %v55 = vshll.u32 2102212464, %v43
  %v56 = vshrl.u32 920167782, %v44
  %v57 = vor.u32 %v55, %v56
  %v58 = vshll.u32 920167782, %v43
  %v59 = vshrl.u32 1326507024, %v44
  %v60 = vor.u32 %v58, %v59
  %vm61 = vcmp.lt.s32.totalorder %v42, 1
  %vm62 = vcmp.lt.s32.totalorder %v42, 2
  %vm63 = vcmp.lt.s32.totalorder %v42, 3
  %vm64 = vcmp.lt.s32.totalorder %v42, 4
  %v65 = vsel %vm61, %v45, %v48
  %v66 = vsel %vm64, %v54, 2102212464
  %v67 = vsel %vm63, %v51, %v66
  %v68 = vsel %vm62, %v65, %v67
  %v69 = vsel %vm61, %v48, %v51
  %v70 = vsel %vm64, %v57, 920167782
  %v71 = vsel %vm63, %v54, %v70
  %v72 = vsel %vm62, %v69, %v71
  %v73 = vsel %vm61, %v51, %v54
  %v74 = vsel %vm64, %v60, 1326507024
  %v75 = vsel %vm63, %v57, %v74
  %v76 = vsel %vm62, %v73, %v75
  %v77 = vshll.u32 %v37, 8
  %v78 = vmul.u32.u64.compose %v77, %v76
  %v79 = vextract.low.u32 %v78
  %v80 = vextract.high.u32 %v78
  %v81 = vmul.u32.u64.compose %v77, %v72
  %v82 = vextract.low.u32 %v81
  %v83 = vextract.high.u32 %v81
  %v84 = vmul.u32 %v77, %v68
  %v85 = vadd.s32 %v80, %v82
  %vm86 = vc.u32 %v80, %v82
  %v87 = vadd.s32 %v83, 1
  %v88 = vsel %vm86, %v87, %v83
  %v89 = vadd.s32 %v84, %v88
  %v90 = vadd.s32 %v89, 536870912
  %v91 = vshrl.u32 %v90, 30
  %v92 = vshll.u32 %v91, 30
  %v93 = vsub.s32 %v89, %v92
  %vm94 = vcmp.lt.s32.totalorder %v93, 0
  %v95 = vsub.s32 0, %v93
  %v96 = vsel %vm94, %v95, %v93
  %v97 = vclz %v96
  %v98 = vsub.s32 %v97, 2
  %vm99 = vcmp.gt.s32.totalorder 0, %v98
  %v100 = vsel %vm99, 0, %v98
  %v101 = vsub.s32 32, %v100
  %v102 = vshll.u32 %v93, %v100
  %v103 = vshrl.u32 %v85, %v101
  %v104 = vor.u32 %v102, %v103
  %v105 = vsub.s32 4294967266, %v100
  %v106 = vadd.s32 %v105, 127
  %v107 = vshll.u32 %v106, 23
  %v108 = vor.u32 4788187, %v107
  %v109 = vand.u32 2147483647, %v108
  %v111 = vcvt.s32.f32 %v104
  %v112 = vmul.f32 %v111, %v109
  %v113 = vxor.u32 %v112, 2147483648
  %v114 = vsel %vm31, %v113, %v112
  %v115 = vsub.s32 4, %v91
  %v116 = vsel %vm31, %v115, %v91
  %v117 = vsel %vm30, %v28, %v114
  %v118 = vsel %vm30, 0, %v116
  %v119 = vcosq.f32.pop %v117
  %v120 = vsinq.f32.pop %v117
  %vm121 = vweird.f32 %v28
  %v122 = vadd.s32 %v118, 3
  %v123 = vand.u32 %v122, 3
  %vm124 = vcmp.lt.s32.totalorder %v123, 2
  %vm125 = vcmp.eq.s32.totalorder %v123, 0
  %v126 = vxor.u32 %v120, 2147483648
  %v127 = vsel %vm125, %v119, %v126
  %vm128 = vcmp.eq.s32.totalorder %v123, 2
  %v129 = vxor.u32 %v119, 2147483648
  %v130 = vsel %vm128, %v129, %v120
  %v131 = vsel %vm124, %v127, %v130
  %v132 = vsel %vm121, nan, %v131
  %134 = vrot.lane.b32.xlu0 %v132, 32
  %v135 = vpop.permute.xlu0 %134
  %vm137 = vcmask 261120
  %v138 = vsel %vm137, %v132, %v135
  %v139 = vld [vmem:[%s0] sm:$0xff]
  %v140 = vadd.f32 %v139, %v138
  %vm141 = vcmask 523264
  %142 = vst.msk [vmem:[%s2] sm:$0xff] %vm141, %v140
  // Predicated region
  $region10: #{_cape1d_impl.1} parent=0 // pred_check
    _
  $region11: #{_cape1d_impl.1} parent=0 // pred_check_branch
    %144 = sbr.rel (0) target = $region13
  $region12: #{_cape1d_impl.1} parent=0 // pred_region
    _
  $region13: #{_cape1d_impl.1} parent=0 // pred_fallthru
    _
  // Predicated region
  $region14: #{_cape1d_impl.1} parent=0 // pred_check
    _
  $region15: #{_cape1d_impl.1} parent=0 // pred_check_branch
    %146 = sbr.rel (0) target = $region17
  $region16: #{_cape1d_impl.1} parent=0 // pred_region
    _
  $region17: #{_cape1d_impl.1} parent=0 // pred_fallthru
    _

</llo_original>
